<compile_context>
chip_gen: v6e
topology: v6e:2x2x1
jax: 0.10.0
libtpu: 0.0.40
codegen_flags: <defaults>
</compile_context>

<pallas_src>
import numpy as np
import jax
import jax.numpy as jnp
from jax import lax
from jax.experimental import pallas as pl
from jax.experimental.pallas import tpu as pltpu

SEQ_LEN = 24
LABEL_LEN = 24
PRED_LEN = 6
ENC_IN = 1
MULTISCALE = (1, 2, 4)
N_HIPPO = 256                                    # window_size = [256]
MODES = min(32, min(PRED_LEN, SEQ_LEN) // 2)     # = 3

MAX_BATCH_TILE = 1024                            # rows per grid step for large B (multiple of 8)


# --------------------------- host-side (numpy, float64) constant construction ---------------------

def transition(N):
    Q = np.arange(N, dtype=np.float64)
    R = (2 * Q + 1)[:, None]
    j, i = np.meshgrid(Q, Q)
    A = np.where(i < j, -1, (-1.0) ** (i - j + 1)) * R
    B = (-1.0) ** Q[:, None] * R
    return A, B


def cont2discrete_bilinear(A, B, dt):
    # scipy.signal.cont2discrete(..., method='bilinear')  == gbt with alpha = 0.5
    N = A.shape[0]
    I = np.eye(N)
    ima = I - 0.5 * dt * A
    Ad = np.linalg.solve(ima, I + 0.5 * dt * A)
    Bd = np.linalg.solve(ima, dt * B)
    return Ad, Bd


def eval_legendre_matrix(N, x):
    # scipy.special.eval_legendre(np.arange(N)[:, None], x).T  -> (len(x), N)
    x = np.asarray(x, dtype=np.float64)
    P = np.zeros((N, x.shape[0]), dtype=np.float64)
    P[0] = 1.0
    if N > 1:
        P[1] = x
    for n in range(1, N - 1):
        P[n + 1] = ((2 * n + 1) * x * P[n] - n * P[n - 1]) / (n + 1)
    return P.T


def _scale_constants(mult):
    """Per-scale HiPPO discretization + Legendre evaluation matrix (float64)."""
    L = mult * PRED_LEN
    dt = 1.0 / PRED_LEN / mult
    A, Bm = transition(N_HIPPO)
    Ad, Bd = cont2discrete_bilinear(A, Bm, dt)
    Bd = Bd.squeeze(-1)                                            # (N,)
    vals = np.arange(0.0, 1.0, dt)                                 # exactly as in the reference
    eval_matrix = eval_legendre_matrix(N_HIPPO, 1.0 - 2.0 * vals)  # (len(vals), N)
    E = eval_matrix[-PRED_LEN:, :].T                               # (N, pred_len)
    return L, Ad, Bd, E


def _fold_scale_matrix(mult, Wr, Wi):
    """Fold the full per-scale linear pipeline into a single (L, pred_len) matrix.

    normalized input x_in (length L) ->
      c_t = c_{t-1} @ A^T + x_t * B                       (HiPPO-LegT recurrence)
      F_k = rfft(c)_k, k < MODES                          (cos/sin sums over t)
      X_k = complex mode mix with (weights_real, weights_imag)
      y   = irfft(X)[t = pred_len-1]                      (only slice used downstream)
      dec = y @ eval_matrix[-pred_len:, :].T
    Everything is linear in x_in, so apply the pipeline to the L unit impulses
    (identity matrix) in float64 and read off the matrix.
    """
    L, Ad, Bd, E = _scale_constants(mult)

    # torch.fft.rfft over time (length L), first MODES bins, as real cos/sin sums
    t = np.arange(L, dtype=np.float64)[:, None]
    k = np.arange(MODES, dtype=np.float64)[None, :]
    ang = 2.0 * np.pi * k * t / L
    cosm = np.cos(ang)            # Re(F_k) weights   (L, MODES)
    sinm = -np.sin(ang)           # Im(F_k) weights

    # torch.fft.irfft(out_ft, n=L) evaluated only at t_out = pred_len-1 (jump_dist = 0)
    t_out = PRED_LEN - 1
    kk = np.arange(MODES, dtype=np.float64)
    coef = np.where(kk == 0, 1.0, 2.0) / L
    theta = 2.0 * np.pi * kk * t_out / L
    wr_inv = coef * np.cos(theta)
    wi_inv = -coef * np.sin(theta)

    # fold the irfft coefficients into the (real, imag) spectral weights per mode
    WRf = wr_inv[None, None, :] * Wr + wi_inv[None, None, :] * Wi  # (N, N, MODES)
    WIf = wi_inv[None, None, :] * Wr - wr_inv[None, None, :] * Wi

    # HiPPO recurrence applied to the L unit impulses (rows of the identity)
    A_T = Ad.T
    c = np.zeros((L, N_HIPPO), dtype=np.float64)
    aR = np.zeros((MODES, L, N_HIPPO), dtype=np.float64)
    aI = np.zeros((MODES, L, N_HIPPO), dtype=np.float64)
    for tt in range(L):
        impulse = np.zeros((L, 1), dtype=np.float64)
        impulse[tt, 0] = 1.0
        c = c @ A_T + impulse * Bd[None, :]
        for m in range(MODES):
            aR[m] += c * cosm[tt, m]
            aI[m] += c * sinm[tt, m]

    y = np.zeros((L, N_HIPPO), dtype=np.float64)
    for m in range(MODES):
        y += aR[m] @ WRf[:, :, m] + aI[m] @ WIf[:, :, m]

    return y @ E                                                   # (L, pred_len)


def build_params(key):
    keys = jax.random.split(key, 8)

    # nn.Parameter(torch.ones(1,1,enc_in)) / zeros, enc_in == 1 -> scalars
    affine_weight = np.float64(1.0)
    affine_bias = np.float64(0.0)

    # SpectralConv1d weights: scale * rand(in, out, modes)
    wscale = 1.0 / (N_HIPPO * N_HIPPO)
    spec = []
    for i in range(len(MULTISCALE)):
        wr = wscale * jax.random.uniform(keys[i], (N_HIPPO, N_HIPPO, MODES), jnp.float32)
        wi = wscale * jax.random.uniform(keys[i + 3], (N_HIPPO, N_HIPPO, MODES), jnp.float32)
        spec.append((np.asarray(wr, np.float64), np.asarray(wi, np.float64)))

    # mlp = nn.Linear(3, 1)
    bound = 1.0 / np.sqrt(len(MULTISCALE))
    mlp_w = np.asarray(
        jax.random.uniform(keys[6], (len(MULTISCALE),), jnp.float32, -bound, bound), np.float64)
    mlp_b = float(np.asarray(
        jax.random.uniform(keys[7], (), jnp.float32, -bound, bound), np.float64))

    # Fold all three scales + the mlp mix into one (SEQ_LEN, PRED_LEN) matrix.
    # Scale i consumes x_in = xn[:, SEQ_LEN - L_i :], i.e. the bottom L_i rows.
    W_all = np.zeros((SEQ_LEN, PRED_LEN), dtype=np.float64)
    for idx, mult in enumerate(MULTISCALE):
        L = mult * PRED_LEN
        W_all[SEQ_LEN - L:, :] += mlp_w[idx] * _fold_scale_matrix(mult, *spec[idx])

    # Fold affine_weight / affine_bias / mlp bias into the matmul (float64):
    #   xn  = aw * z + ab,          pre = xn @ W_all + mlp_b
    #   out = (pre - ab) / (aw + 1e-10) * std + mean
    # =>
    #   out = (z @ W_eff + b_eff) * std + mean
    denom = affine_weight + 1e-10
    W_eff = (affine_weight / denom) * W_all
    b_eff = (affine_bias * W_all.sum(axis=0) + mlp_b - affine_bias) / denom

    params = {
        'W_eff': jnp.asarray(W_eff, jnp.float32),                        # (SEQ_LEN, PRED_LEN)
        'b_eff': jnp.asarray(b_eff.reshape(1, PRED_LEN), jnp.float32),   # (1, PRED_LEN)
    }
    host = dict(spec=spec, mlp_w=mlp_w, mlp_b=mlp_b,
                affine_weight=float(affine_weight), affine_bias=float(affine_bias))
    return params, host


# ----------------------------------------- Pallas kernel ------------------------------------------

def _film_fused_kernel(x_ref, w_ref, b_ref, out_ref):
    # x_ref: (TB, SEQ_LEN), w_ref: (SEQ_LEN, PRED_LEN), b_ref: (1, PRED_LEN)
    x = x_ref[...]

    # RevIN-style normalization (unbiased=False, eps=1e-5 inside the sqrt)
    mean = jnp.mean(x, axis=1, keepdims=True)                    # (TB, 1)
    xc = x - mean
    var = jnp.mean(xc * xc, axis=1, keepdims=True)
    inv_std = lax.rsqrt(var + 1e-5)                              # EUP, no divide
    std = (var + 1e-5) * inv_std                                 # == sqrt(var + 1e-5)
    z = xc * inv_std                                             # (TB, SEQ_LEN)

    # Folded HiPPO + rfft + SpectralConv1d + irfft@(pred_len-1) + Legendre proj + mlp
    pre = jnp.dot(z, w_ref[...], preferred_element_type=jnp.float32) + b_ref[...]

    # de-normalization (affine params already folded into w_ref / b_ref)
    out_ref[...] = pre * std + mean


# -------------------------------------------- forward ---------------------------------------------

@jax.jit
def forward(params, x_enc, x_mark_enc=None, x_dec=None, x_mark_dec=None):
    B = x_enc.shape[0]
    x2d = x_enc[:, :, 0].astype(jnp.float32)                     # enc_in == 1

    # Batch grid: single block for small B, 1024-row tiles (multiple of 8) otherwise.
    tb = B if B <= MAX_BATCH_TILE else MAX_BATCH_TILE
    grid = (pl.cdiv(B, tb),)

    out = pl.pallas_call(
        _film_fused_kernel,
        out_shape=jax.ShapeDtypeStruct((B, PRED_LEN), jnp.float32),
        grid=grid,
        in_specs=[
            pl.BlockSpec((tb, SEQ_LEN), lambda i: (i, 0)),
            pl.BlockSpec((SEQ_LEN, PRED_LEN), lambda i: (0, 0)),
            pl.BlockSpec((1, PRED_LEN), lambda i: (0, 0)),
        ],
        out_specs=pl.BlockSpec((tb, PRED_LEN), lambda i: (i, 0)),
        compiler_params=pltpu.CompilerParams(dimension_semantics=("parallel",)),
    )(x2d, params['W_eff'], params['b_eff'])

    return out[:, :, None]                                       # (B, pred_len, 1)


# ------------------------------ independent float64 numpy reference -------------------------------

def _reference_forward_numpy(x_enc, host):
    """Direct float64 implementation of Model.forecast (per-scale pipeline, no folding)."""
    x = np.asarray(x_enc, np.float64)[:, :, 0]                   # (B, SEQ_LEN)
    aw, ab = host['affine_weight'], host['affine_bias']
    means = x.mean(axis=1, keepdims=True)
    xc = x - means
    var = (xc * xc).mean(axis=1, keepdims=True)
    std = np.sqrt(var + 1e-5)
    xn = (xc / std) * aw + ab

    decs = []
    for idx, mult in enumerate(MULTISCALE):
        Wr, Wi = host['spec'][idx]
        L, Ad, Bd, E = _scale_constants(mult)
        x_in = xn[:, SEQ_LEN - L:]
        Bn = x.shape[0]
        c = np.zeros((Bn, N_HIPPO), dtype=np.float64)
        cs = []
        for t in range(L):
            c = c @ Ad.T + x_in[:, t:t + 1] * Bd[None, :]
            cs.append(c)
        cst = np.stack(cs, axis=-1)                              # (B, N, L)  time-last
        xft = np.fft.rfft(cst, axis=-1)
        a = xft[:, :, :MODES]
        outr = np.einsum('bix,iox->box', a.real, Wr) - np.einsum('bix,iox->box', a.imag, Wi)
        outi = np.einsum('bix,iox->box', a.real, Wi) + np.einsum('bix,iox->box', a.imag, Wr)
        out_ft = np.zeros((Bn, N_HIPPO, L // 2 + 1), dtype=np.complex128)
        out_ft[:, :, :MODES] = outr + 1j * outi
        xtime = np.fft.irfft(out_ft, n=L, axis=-1)               # (B, N, L)
        x_dec_c = xtime[:, :, PRED_LEN - 1]                      # jump_dist = 0
        decs.append(x_dec_c @ E)                                 # (B, pred_len)

    stacked = np.stack(decs, axis=-1)                            # (B, pred_len, 3)
    pre = stacked @ host['mlp_w'] + host['mlp_b']                # (B, pred_len)
    out = (pre - ab) / (aw + 1e-10) * std + means
    return out[:, :, None]


# --------------------------------------------- main -----------------------------------------------

if __name__ == "__main__":
    key = jax.random.PRNGKey(0)
    kp, kx = jax.random.split(key)
    params, host = build_params(kp)

    B = 2
    x_enc = jax.random.normal(kx, (B, SEQ_LEN, ENC_IN), dtype=jnp.float32)
    x_mark_enc = jnp.zeros((B, SEQ_LEN, 4), jnp.float32)             # unused by forecast path
    x_dec_in = jnp.zeros((B, LABEL_LEN + PRED_LEN, ENC_IN), jnp.float32)
    x_mark_dec = jnp.zeros((B, LABEL_LEN + PRED_LEN, 4), jnp.float32)

    out = forward(params, x_enc, x_mark_enc, x_dec_in, x_mark_dec)
    out = jax.block_until_ready(out)
    assert out.shape == (B, PRED_LEN, ENC_IN)
    assert bool(jnp.all(jnp.isfinite(out)))

    # cross-check the fused/folded kernel against the direct per-scale pipeline
    ref = _reference_forward_numpy(np.asarray(x_enc), host)
    np.testing.assert_allclose(np.asarray(out), ref, rtol=2e-3, atol=2e-3)

    print("KERNEL_OK")
</pallas_src>

<mosaic_0001>
module attributes {stable_mosaic.version = 11 : i64} {
  func.func @_film_fused_kernel(%arg0: i32, %arg1: memref<2x24xf32, #tpu.memory_space<vmem>>, %arg2: memref<24x6xf32, #tpu.memory_space<vmem>>, %arg3: memref<1x6xf32, #tpu.memory_space<vmem>>, %arg4: memref<2x6xf32, #tpu.memory_space<vmem>>) attributes {dimension_semantics = [#tpu.dimension_semantics<parallel>], iteration_bounds = array<i64: 1>, scalar_prefetch = 0 : i64, scratch_operands = 0 : i64, tpu.core_type = #tpu.core_type<tc>, window_params = [{transform_indices = @transform_0, window_bounds = array<i64: 2, 24>}, {pipeline_mode = #tpu.pipeline_mode<synchronous>, transform_indices = @transform_1, window_bounds = array<i64: 24, 6>}, {pipeline_mode = #tpu.pipeline_mode<synchronous>, transform_indices = @transform_2, window_bounds = array<i64: 1, 6>}, {transform_indices = @transform_3, window_bounds = array<i64: 2, 6>}]} {
    %c0 = arith.constant 0 : index
    %c0_0 = arith.constant 0 : index
    %0 = vector.load %arg1[%c0, %c0_0] : memref<2x24xf32, #tpu.memory_space<vmem>>, vector<2x24xf32>
    %cst = arith.constant dense<0.000000e+00> : vector<2xf32>
    %1 = vector.multi_reduction <add>, %0, %cst [1] : vector<2x24xf32> to vector<2xf32>
    %2 = vector.shape_cast %1 : vector<2xf32> to vector<2x1xf32>
    %cst_1 = arith.constant 2.400000e+01 : f32
    %3 = vector.broadcast %cst_1 : f32 to vector<2x1xf32>
    %4 = arith.divf %2, %3 : vector<2x1xf32>
    %5 = vector.broadcast %4 : vector<2x1xf32> to vector<2x24xf32>
    %6 = arith.subf %0, %5 : vector<2x24xf32>
    %7 = arith.mulf %6, %6 : vector<2x24xf32>
    %cst_2 = arith.constant dense<0.000000e+00> : vector<2xf32>
    %8 = vector.multi_reduction <add>, %7, %cst_2 [1] : vector<2x24xf32> to vector<2xf32>
    %9 = vector.shape_cast %8 : vector<2xf32> to vector<2x1xf32>
    %cst_3 = arith.constant 2.400000e+01 : f32
    %10 = vector.broadcast %cst_3 : f32 to vector<2x1xf32>
    %11 = arith.divf %9, %10 : vector<2x1xf32>
    %cst_4 = arith.constant 9.99999974E-6 : f32
    %12 = vector.broadcast %cst_4 : f32 to vector<2x1xf32>
    %13 = arith.addf %11, %12 : vector<2x1xf32>
    %14 = math.rsqrt %13 : vector<2x1xf32>
    %cst_5 = arith.constant 9.99999974E-6 : f32
    %15 = vector.broadcast %cst_5 : f32 to vector<2x1xf32>
    %16 = arith.addf %11, %15 : vector<2x1xf32>
    %17 = arith.mulf %16, %14 : vector<2x1xf32>
    %18 = vector.broadcast %14 : vector<2x1xf32> to vector<2x24xf32>
    %19 = arith.mulf %6, %18 : vector<2x24xf32>
    %c0_6 = arith.constant 0 : index
    %c0_7 = arith.constant 0 : index
    %20 = vector.load %arg2[%c0_6, %c0_7] : memref<24x6xf32, #tpu.memory_space<vmem>>, vector<24x6xf32>
    %cst_8 = arith.constant dense<0.000000e+00> : vector<2x6xf32>
    %21 = tpu.matmul %19, %20, %cst_8 {dimension_numbers = #tpu.dot_dimension_numbers<[1], [0], [0], [1], [0, 0, 1, 1], [], []>} : vector<2x24xf32>, vector<24x6xf32>, vector<2x6xf32> -> vector<2x6xf32>
    %c0_9 = arith.constant 0 : index
    %c0_10 = arith.constant 0 : index
    %22 = vector.load %arg3[%c0_9, %c0_10] : memref<1x6xf32, #tpu.memory_space<vmem>>, vector<1x6xf32>
    %23 = vector.broadcast %22 : vector<1x6xf32> to vector<2x6xf32>
    %24 = arith.addf %21, %23 : vector<2x6xf32>
    %25 = vector.broadcast %17 : vector<2x1xf32> to vector<2x6xf32>
    %26 = arith.mulf %24, %25 : vector<2x6xf32>
    %27 = vector.broadcast %4 : vector<2x1xf32> to vector<2x6xf32>
    %28 = arith.addf %26, %27 : vector<2x6xf32>
    %c0_11 = arith.constant 0 : index
    %c0_12 = arith.constant 0 : index
    %29 = vector.load %arg4[%c0_11, %c0_12] : memref<2x6xf32, #tpu.memory_space<vmem>>, vector<2x6xf32>
    tpu.vector_store %arg4[%c0_11, %c0_12], %28 {strides = array<i32>} : memref<2x6xf32, #tpu.memory_space<vmem>>, vector<2x6xf32>,
    return
  }
  func.func @transform_0(%arg0: i32) -> (i32, i32) {
    %c0_i32 = arith.constant 0 : i32
    %c0_i32_0 = arith.constant 0 : i32
    return %arg0, %c0_i32 : i32, i32
  }
  func.func @transform_1(%arg0: i32) -> (i32, i32) {
    %c0_i32 = arith.constant 0 : i32
    %c0_i32_0 = arith.constant 0 : i32
    %c0_i32_1 = arith.constant 0 : i32
    return %c0_i32, %c0_i32_0 : i32, i32
  }
  func.func @transform_2(%arg0: i32) -> (i32, i32) {
    %c0_i32 = arith.constant 0 : i32
    %c0_i32_0 = arith.constant 0 : i32
    %c0_i32_1 = arith.constant 0 : i32
    return %c0_i32, %c0_i32_0 : i32, i32
  }
  func.func @transform_3(%arg0: i32) -> (i32, i32) {
    %c0_i32 = arith.constant 0 : i32
    %c0_i32_0 = arith.constant 0 : i32
    return %arg0, %c0_i32 : i32, i32
  }
}

</mosaic_0001>

<llo_original>
// kernel: forward.1
$region0: #{forward.1}
  #allocation0 [shape = 'u32[]', space=smem, size = 0x4, offset = 0x4, fixed_abs, tag = 'smem constant byte address 0x4 - core index']
  #allocation1 [shape = 'u32[144,128]{1,0:T(1,128)}', space=vmem, size = 0x12000, scoped, tag = 'internal scratch']
  %s0 = inlined_call_operand.vmem [shape: f32[2,24], index: 0, kind: input, shape index: {}]
  %s1 = inlined_call_operand.vmem [shape: f32[24,6], index: 1, kind: input, shape index: {}]
  %s2 = inlined_call_operand.vmem [shape: f32[1,6], index: 2, kind: input, shape index: {}]
  %s3 = inlined_call_operand.hbm [shape: f32[2,6], index: 3, kind: output, shape index: {}]
  %s4 = sld [smem:[#allocation0]]
  $region22: #{forward.1} parent=0
    _
  %s6 = ssub.s32 1, %s4
  %s7 = scalar_select 0, %s6, %s4
  $region1: #{forward.1} parent=0
    #allocation2 [shape = 'u8[1024]{0}', space=vmem, size = 0x400, scoped, tag = 'output window, operand 0, single buffered']
    #allocation3 [shape = 's32[1]{0}', space=sflag, size = 0x4, scoped, tag = 'scoped memory for forward.1']
    %8 = vsyncpa [#allocation3], 0
    // Predicated region
    $region2: #{forward.1} parent=1 // pred_check
      _
    $region3: #{forward.1} parent=1 // pred_check_branch
      %10 = sbr.rel (0) target = $region5
    $region4: #{forward.1} parent=1 // pred_region
      _
    $region5: #{forward.1} parent=1 // pred_fallthru
      _
    // Predicated region
    $region6: #{forward.1} parent=1 // pred_check
      _
    $region7: #{forward.1} parent=1 // pred_check_branch
      %12 = sbr.rel (0) target = $region9
    $region8: #{forward.1} parent=1 // pred_region
      _
    $region9: #{forward.1} parent=1 // pred_fallthru
      _
    // Predicated region
    $region10: #{forward.1} parent=1 // pred_check
      _
    $region11: #{forward.1} parent=1 // pred_check_branch
      %14 = sbr.rel (0) target = $region13
    $region12: #{forward.1} parent=1 // pred_region
      _
    $region13: #{forward.1} parent=1 // pred_fallthru
      _
    %v15 = vld [vmem:[%s0] sm:$0x3]
    %vm16 = vcmask 189440
    %v17 = vsel %vm16, %v15, 0.0
    %18 = vadd.xlane.f32.xlu0 %v17
    %v19 = vpop.xlane.xlu0 %18
    %v20 = vrcp.pop 24.0
    %v21 = vmul.f32 %v19, %v20
    %v22 = vsub.f32 %v15, %v21
    %v23 = vmul.f32 %v22, %v22
    %v24 = vsel %vm16, %v23, 0.0
    %25 = vadd.xlane.f32.xlu0 %v24
    %v26 = vpop.xlane.xlu0 %25
    %v27 = vmul.f32 %v26, %v20
    %v28 = vadd.f32 %v27, 1e-05
    %v29 = vrsqrt.pop %v28
    %v30 = vmul.f32 %v28, %v29
    %v31 = vmul.f32 %v22, %v29
    %v32 = vld [vmem:[%s1] sm:$0xff]
    %v33 = vld [vmem:[%s1 + $0x8] sm:$0xff]
    %v34 = vld [vmem:[%s1 + $0x10] sm:$0xff]
    %v35 = vld [vmem:[%s2] sm:$0x1]
    %v37 = vlaneseq
    %v38 = vshrl.u32 %v37, 7
    %v39 = vsub.s32 0, %v38
    %v40 = vrot.slane %v35, %v39
    %vm42 = vcmask 195584
    %v44 = vsel %vm42, %v31, 0
    %46 = vmatprep.subr.mxu0 0.0
    %47 = vmatpush1.msra.mxu0 0.0
    %48 = vmatprep.subr.mxu0 0.0
    %49 = vmatpush1.msra.mxu0 0.0
    %50 = vmatprep.subr.mxu0 0.0
    %51 = vmatpush1.msra.mxu0 0.0
    %52 = vmatprep.subr.mxu0 0.0
    %53 = vmatpush1.msra.mxu0 0.0
    %54 = vmatprep.subr.mxu0 0.0
    %55 = vmatpush1.msra.mxu0 0.0
    %56 = vmatprep.subr.mxu0 0.0
    %57 = vmatpush1.msra.mxu0 0.0
    %58 = vmatprep.subr.mxu0 0.0
    %59 = vmatpush1.msra.mxu0 0.0
    %60 = vmatprep.subr.mxu0 0.0
    %61 = vmatpush1.msra.mxu0 0.0
    %62 = vmatprep.subr.mxu0 0.0
    %63 = vmatpush1.msra.mxu0 0.0
    %64 = vmatprep.subr.mxu0 0.0
    %65 = vmatpush1.msra.mxu0 0.0
    %66 = vmatprep.subr.mxu0 0.0
    %67 = vmatpush1.msra.mxu0 0.0
    %68 = vmatprep.subr.mxu0 0.0
    %69 = vmatpush1.msra.mxu0 0.0
    %70 = vmatprep.subr.mxu0 0.0
    %71 = vmatpush1.msra.mxu0 0.0
    %72 = vmatprep.subr.mxu0 0.0
    %73 = vmatpush1.msra.mxu0 %v34
    %74 = vmatprep.subr.mxu0 0.0
    %75 = vmatpush1.msra.mxu0 %v33
    %76 = vmatprep.subr.mxu0 0.0
    %77 = vmatpush1.msra.mxu0 %v32
    %78 = vmatprep.subr.mxu0 0.0
    %79 = vmatpush2.msra.mxu0 0.0
    %80 = vmatprep.subr.mxu0 0.0
    %81 = vmatpush2.msra.mxu0 0.0
    %82 = vmatprep.subr.mxu0 0.0
    %83 = vmatpush2.msra.mxu0 0.0
    %84 = vmatprep.subr.mxu0 0.0
    %85 = vmatpush2.msra.mxu0 0.0
    %86 = vmatprep.subr.mxu0 0.0
    %87 = vmatpush2.msra.mxu0 0.0
    %88 = vmatprep.subr.mxu0 0.0
    %89 = vmatpush2.msra.mxu0 0.0
    %90 = vmatprep.subr.mxu0 0.0
    %91 = vmatpush2.msra.mxu0 0.0
    %92 = vmatprep.subr.mxu0 0.0
    %93 = vmatpush2.msra.mxu0 0.0
    %94 = vmatprep.subr.mxu0 0.0
    %95 = vmatpush2.msra.mxu0 0.0
    %96 = vmatprep.subr.mxu0 0.0
    %97 = vmatpush2.msra.mxu0 0.0
    %98 = vmatprep.subr.mxu0 0.0
    %99 = vmatpush2.msra.mxu0 0.0
    %100 = vmatprep.subr.mxu0 0.0
    %101 = vmatpush2.msra.mxu0 0.0
    %102 = vmatprep.subr.mxu0 0.0
    %103 = vmatpush2.msra.mxu0 0.0
    %104 = vmatprep.subr.mxu0 0.0
    %105 = vmatpush2.msra.mxu0 0.0
    %106 = vmatprep.subr.mxu0 0.0
    %107 = vmatpush2.msra.mxu0 0.0
    %108 = vmatprep.subr.mxu0 0.0
    %109 = vmatpush2.msra.mxu0 0.0
    %110 = vmatprep.mubr.f32.mxu0 0.0
    %111 = vmatmul.mubr.f32.gmra.mxu0 %v44
    %v112 = vpop.f32.mrf.mxu0
    %v113 = vadd.f32 %v40, %v112
    %v114 = vpop.f32.mrf.mxu0
    %115 = vdwg.mxu0
    %v116 = vmul.f32 %v113, %v30
    %v117 = vadd.f32 %v116, %v21
    %vm118 = vcmask 41984
    %119 = vst.msk [vmem:[#allocation2] sm:$0x3] %vm118, %v117
    // Predicated region
    $region14: #{forward.1} parent=1 // pred_check
      _
    $region15: #{forward.1} parent=1 // pred_check_branch
      %121 = sbr.rel (0) target = $region17
    $region16: #{forward.1} parent=1 // pred_region
      %s123 = ssub.s32 32, 32
      %124 = vsyncadd [#allocation3], %s123
      %s126 = sshll.u32 [#allocation2], 4
      %s127 = int_to_ptr.vmem [resolvable:$true] %s126
      %129 = dma.vmem_to_hbm [thread:$0]  %s127, 32, %s3, [#allocation3]
    $region17: #{forward.1} parent=1 // pred_fallthru
      _
    // Predicated region
    $region18: #{forward.1} parent=1 // pred_check
      _
    $region19: #{forward.1} parent=1 // pred_check_branch
      %131 = sbr.rel (0) target = $region21
    $region20: #{forward.1} parent=1 // pred_region
      %132 = dma.done [#allocation3], 32
    $region21: #{forward.1} parent=1 // pred_fallthru
      _
    %133 = vsyncpa [#allocation3], 1

</llo_original>
